<compile_context>
chip_gen: v7x
topology: tpu7x:2x2x1
jax: 0.10.0
libtpu: 0.0.40
codegen_flags: <defaults>
</compile_context>

<pallas_src>
import math
from functools import partial

import jax
import jax.numpy as jnp
from jax.experimental import pallas as pl
from jax.experimental.pallas import tpu as pltpu

F32 = jnp.float32
BF16 = jnp.bfloat16
LN_EPS = 1e-5
# Conservative scoped-VMEM budget: fits v7x (64 MiB/TC) and is plenty on v5e/v6e.
VMEM_LIMIT = 48 * 1024 * 1024


def _pick_tile(dim, target):
    """Largest divisor of `dim` that is <= target (keeps every grid evenly tiled)."""
    t = max(1, min(dim, target))
    while dim % t:
        t -= 1
    return t


# --------------------- fused LayerNorm + projection (QKV) ----------------------

def _ln_matmul_kernel(x_ref, g_ref, b_ref, w_ref, o_ref):
    x = x_ref[...]                                             # (tm, D) f32
    mean = jnp.mean(x, axis=-1, keepdims=True)
    xc = x - mean
    var = jnp.mean(xc * xc, axis=-1, keepdims=True)
    xn = xc * jax.lax.rsqrt(var + LN_EPS) * g_ref[...] + b_ref[...]
    o_ref[...] = jnp.dot(xn.astype(BF16), w_ref[...],
                         preferred_element_type=F32)


def ln_matmul(x, g, b, w, *, tm=256, tn=512):
    """o = LayerNorm(x) @ w ; x:(N,D) f32, w:(D,Dout) bf16 -> (N,Dout) f32."""
    N, D = x.shape
    Dout = w.shape[1]
    tm = _pick_tile(N, tm)
    tn = _pick_tile(Dout, tn)
    return pl.pallas_call(
        _ln_matmul_kernel,
        out_shape=jax.ShapeDtypeStruct((N, Dout), F32),
        grid=(N // tm, Dout // tn),
        in_specs=[pl.BlockSpec((tm, D), lambda i, j: (i, 0)),
                  pl.BlockSpec((1, D), lambda i, j: (0, 0)),
                  pl.BlockSpec((1, D), lambda i, j: (0, 0)),
                  pl.BlockSpec((D, tn), lambda i, j: (0, j))],
        out_specs=pl.BlockSpec((tm, tn), lambda i, j: (i, j)),
        compiler_params=pltpu.CompilerParams(
            dimension_semantics=("parallel", "parallel"),
            vmem_limit_bytes=VMEM_LIMIT),
    )(x, g, b, w)


# ---------------- tiled matmul + residual add (attention out-proj) --------------

def _matmul_residual_kernel(x_ref, w_ref, r_ref, o_ref, acc_ref):
    k = pl.program_id(2)

    @pl.when(k == 0)
    def _():
        acc_ref[...] = jnp.zeros_like(acc_ref)

    acc_ref[...] += jnp.dot(x_ref[...].astype(BF16), w_ref[...],
                            preferred_element_type=F32)

    @pl.when(k == pl.num_programs(2) - 1)
    def _():
        o_ref[...] = acc_ref[...] + r_ref[...]


def matmul_residual(x, w, res, *, tm=256, tn=512, tk=512):
    """o = res + x @ w ; x:(N,K) f32, w:(K,Dout) bf16, res:(N,Dout) f32."""
    N, K = x.shape
    Dout = w.shape[1]
    tm = _pick_tile(N, tm)
    tn = _pick_tile(Dout, tn)
    tk = _pick_tile(K, tk)
    return pl.pallas_call(
        _matmul_residual_kernel,
        out_shape=jax.ShapeDtypeStruct((N, Dout), F32),
        grid=(N // tm, Dout // tn, K // tk),
        in_specs=[pl.BlockSpec((tm, tk), lambda i, j, k: (i, k)),
                  pl.BlockSpec((tk, tn), lambda i, j, k: (k, j)),
                  pl.BlockSpec((tm, tn), lambda i, j, k: (i, j))],
        out_specs=pl.BlockSpec((tm, tn), lambda i, j, k: (i, j)),
        scratch_shapes=[pltpu.VMEM((tm, tn), F32)],
        compiler_params=pltpu.CompilerParams(
            dimension_semantics=("parallel", "parallel", "arbitrary"),
            vmem_limit_bytes=VMEM_LIMIT),
    )(x, w, res)


# -------------- fused LN + MLP (fc -> gelu_new -> proj) + residual --------------

def _mlp_kernel(x_ref, g_ref, b_ref, w1_ref, w2_ref, o_ref):
    x = x_ref[...]                                             # (tm, D) f32
    mean = jnp.mean(x, axis=-1, keepdims=True)
    xc = x - mean
    var = jnp.mean(xc * xc, axis=-1, keepdims=True)
    xn = xc * jax.lax.rsqrt(var + LN_EPS) * g_ref[...] + b_ref[...]
    h = jnp.dot(xn.astype(BF16), w1_ref[...], preferred_element_type=F32)
    c = math.sqrt(2.0 / math.pi)          # GPT-2 "gelu_new" (tanh approx), kept in f32
    h = 0.5 * h * (1.0 + jnp.tanh(c * (h + 0.044715 * h * h * h)))
    o_ref[...] = x + jnp.dot(h.astype(BF16), w2_ref[...],
                             preferred_element_type=F32)


def mlp_block(x, g, b, w_fc, w_proj, *, tm=256):
    """o = x + GELU(LayerNorm(x) @ w_fc) @ w_proj ; row-tiled, weights resident."""
    N, D = x.shape
    Fd = w_fc.shape[1]
    tm = _pick_tile(N, tm)
    return pl.pallas_call(
        _mlp_kernel,
        out_shape=jax.ShapeDtypeStruct((N, D), F32),
        grid=(N // tm,),
        in_specs=[pl.BlockSpec((tm, D), lambda i: (i, 0)),
                  pl.BlockSpec((1, D), lambda i: (0, 0)),
                  pl.BlockSpec((1, D), lambda i: (0, 0)),
                  pl.BlockSpec((D, Fd), lambda i: (0, 0)),
                  pl.BlockSpec((Fd, D), lambda i: (0, 0))],
        out_specs=pl.BlockSpec((tm, D), lambda i: (i, 0)),
        compiler_params=pltpu.CompilerParams(
            dimension_semantics=("parallel",),
            vmem_limit_bytes=VMEM_LIMIT),
    )(x, g, b, w_fc, w_proj)


# ----------------------- flash-style causal attention ---------------------------

def _flash_attn_kernel(q_ref, k_ref, v_ref, o_ref, m_sc, l_sc, acc_sc,
                       *, scale, tq, tk):
    qi = pl.program_id(1)
    ki = pl.program_id(2)

    @pl.when(ki == 0)
    def _():
        m_sc[...] = jnp.full_like(m_sc, -jnp.inf)
        l_sc[...] = jnp.zeros_like(l_sc)
        acc_sc[...] = jnp.zeros_like(acc_sc)

    # Skip kv tiles that lie entirely above the causal diagonal.
    @pl.when(ki * tk <= qi * tq + (tq - 1))
    def _():
        q = q_ref[0].astype(BF16)                              # (tq, hd)
        k = k_ref[0].astype(BF16)                              # (tk, hd)
        s = jax.lax.dot_general(q, k, (((1,), (1,)), ((), ())),
                                preferred_element_type=F32) * scale
        row = jax.lax.broadcasted_iota(jnp.int32, s.shape, 0) + qi * tq
        col = jax.lax.broadcasted_iota(jnp.int32, s.shape, 1) + ki * tk
        s = jnp.where(col <= row, s, -1e30)
        m_prev = m_sc[...]
        m_new = jnp.maximum(m_prev, jnp.max(s, axis=-1, keepdims=True))
        alpha = jnp.exp(m_prev - m_new)
        p = jnp.exp(s - m_new)
        l_sc[...] = alpha * l_sc[...] + jnp.sum(p, axis=-1, keepdims=True)
        acc_sc[...] = alpha * acc_sc[...] + jnp.dot(
            p.astype(BF16), v_ref[0].astype(BF16), preferred_element_type=F32)
        m_sc[...] = m_new

    @pl.when(ki == pl.num_programs(2) - 1)
    def _():
        o_ref[0] = acc_sc[...] * pl.reciprocal(l_sc[...], approx=True)


def attention(q, k, v, *, tq=128, tkv=128):
    """Causal multi-head attention, online softmax. q,k,v: (B*H, T, hd) f32."""
    BH, T, hd = q.shape
    scale = 1.0 / math.sqrt(hd)
    tq = _pick_tile(T, tq)
    tkv = _pick_tile(T, tkv)
    return pl.pallas_call(
        partial(_flash_attn_kernel, scale=scale, tq=tq, tk=tkv),
        out_shape=jax.ShapeDtypeStruct((BH, T, hd), F32),
        grid=(BH, T // tq, T // tkv),
        in_specs=[pl.BlockSpec((1, tq, hd), lambda b, qi, ki: (b, qi, 0)),
                  pl.BlockSpec((1, tkv, hd), lambda b, qi, ki: (b, ki, 0)),
                  pl.BlockSpec((1, tkv, hd), lambda b, qi, ki: (b, ki, 0))],
        out_specs=pl.BlockSpec((1, tq, hd), lambda b, qi, ki: (b, qi, 0)),
        scratch_shapes=[pltpu.VMEM((tq, 1), F32),
                        pltpu.VMEM((tq, 1), F32),
                        pltpu.VMEM((tq, hd), F32)],
        compiler_params=pltpu.CompilerParams(
            dimension_semantics=("parallel", "parallel", "arbitrary"),
            vmem_limit_bytes=VMEM_LIMIT),
    )(q, k, v)


# ------------- fused final-LN + weight-tied LM head + cross-entropy -------------

def _lmhead_ce_kernel(x_ref, g_ref, b_ref, w_ref, t_ref,
                      logits_ref, loss_ref, valid_ref,
                      m_sc, l_sc, tz_sc, *, pad_id, tv):
    j = pl.program_id(1)

    @pl.when(j == 0)
    def _():
        m_sc[...] = jnp.full_like(m_sc, -jnp.inf)
        l_sc[...] = jnp.zeros_like(l_sc)
        tz_sc[...] = jnp.zeros_like(tz_sc)

    x = x_ref[...]                                             # (tm, D) f32
    mean = jnp.mean(x, axis=-1, keepdims=True)
    xc = x - mean
    var = jnp.mean(xc * xc, axis=-1, keepdims=True)
    xn = xc * jax.lax.rsqrt(var + LN_EPS) * g_ref[...] + b_ref[...]

    # Weight-tied head used in its native (V, D) layout -> no HBM-side transpose.
    z = jax.lax.dot_general(xn.astype(BF16), w_ref[...],
                            (((1,), (1,)), ((), ())),
                            preferred_element_type=F32)        # (tm, tv)
    logits_ref[...] = z

    t = t_ref[...]                                             # (tm, 1) int32
    col = jax.lax.broadcasted_iota(jnp.int32, z.shape, 1) + j * tv
    tz_sc[...] += jnp.sum(jnp.where(col == t, z, 0.0), axis=-1, keepdims=True)

    # Online log-sum-exp over the vocab tiles.
    m_prev = m_sc[...]
    m_new = jnp.maximum(m_prev, jnp.max(z, axis=-1, keepdims=True))
    l_sc[...] = l_sc[...] * jnp.exp(m_prev - m_new) + jnp.sum(
        jnp.exp(z - m_new), axis=-1, keepdims=True)
    m_sc[...] = m_new

    @pl.when(j == pl.num_programs(1) - 1)
    def _():
        lse = m_sc[...] + jnp.log(l_sc[...])
        valid = (t != pad_id).astype(F32)
        loss_ref[...] = (lse - tz_sc[...]) * valid
        valid_ref[...] = valid


def lmhead_cross_entropy(x, g, b, wte, targets, pad_id, *, tm=256, tv=2048):
    """Final LayerNorm + LM head (wte in (V,D)) + per-row NLL (ignore_index=pad_id)."""
    N, D = x.shape
    V = wte.shape[0]
    tm = _pick_tile(N, tm)
    tv = _pick_tile(V, tv)
    tgt = targets.reshape(N, 1).astype(jnp.int32)
    return pl.pallas_call(
        partial(_lmhead_ce_kernel, pad_id=pad_id, tv=tv),
        out_shape=(jax.ShapeDtypeStruct((N, V), F32),
                   jax.ShapeDtypeStruct((N, 1), F32),
                   jax.ShapeDtypeStruct((N, 1), F32)),
        grid=(N // tm, V // tv),
        in_specs=[pl.BlockSpec((tm, D), lambda i, j: (i, 0)),
                  pl.BlockSpec((1, D), lambda i, j: (0, 0)),
                  pl.BlockSpec((1, D), lambda i, j: (0, 0)),
                  pl.BlockSpec((tv, D), lambda i, j: (j, 0)),
                  pl.BlockSpec((tm, 1), lambda i, j: (i, 0))],
        out_specs=(pl.BlockSpec((tm, tv), lambda i, j: (i, j)),
                   pl.BlockSpec((tm, 1), lambda i, j: (i, 0)),
                   pl.BlockSpec((tm, 1), lambda i, j: (i, 0))),
        scratch_shapes=[pltpu.VMEM((tm, 1), F32)] * 3,
        compiler_params=pltpu.CompilerParams(
            dimension_semantics=("parallel", "arbitrary"),
            vmem_limit_bytes=VMEM_LIMIT),
    )(x, g, b, wte, tgt)


# ----------------------------- model (glue) --------------------------------

def init_params(key, *, vocab_size, n_positions, d_embed, n_layers):
    std = 0.02
    ks = jax.random.split(key, 2 + 4 * n_layers)
    params = {
        "wte": (std * jax.random.normal(ks[0], (vocab_size, d_embed), F32)).astype(BF16),
        "wpe": std * jax.random.normal(ks[1], (n_positions, d_embed), F32),
        "lnf_g": jnp.ones((1, d_embed), F32),
        "lnf_b": jnp.zeros((1, d_embed), F32),
        "blocks": [],
    }
    for l in range(n_layers):
        kk = ks[2 + 4 * l: 2 + 4 * (l + 1)]
        params["blocks"].append({
            "ln1_g": jnp.ones((1, d_embed), F32),
            "ln1_b": jnp.zeros((1, d_embed), F32),
            "w_attn": (std * jax.random.normal(kk[0], (d_embed, 3 * d_embed), F32)).astype(BF16),
            "w_attn_proj": (std * jax.random.normal(kk[1], (d_embed, d_embed), F32)).astype(BF16),
            "ln2_g": jnp.ones((1, d_embed), F32),
            "ln2_b": jnp.zeros((1, d_embed), F32),
            "w_fc": (std * jax.random.normal(kk[2], (d_embed, 4 * d_embed), F32)).astype(BF16),
            "w_mlp_proj": (std * jax.random.normal(kk[3], (4 * d_embed, d_embed), F32)).astype(BF16),
        })
    return params


def gpt2_forward(params, x, targets, *, n_heads, pad_id):
    """Returns (logits[B,T,V], loss scalar), matching GPT2LMHeadModel + F.cross_entropy."""
    B, T = x.shape
    V, D = params["wte"].shape
    hd = D // n_heads

    # Embedding gather + positional add kept in plain JAX (glue, negligible cost).
    h = params["wte"][x].astype(F32) + params["wpe"][:T][None, :, :]    # (B, T, D)
    h = h.reshape(B * T, D)
    # TODO(synk): dropout layers are omitted (config.dropout assumed 0.0 / eval mode).

    def to_heads(u):
        return (u.reshape(B, T, n_heads, hd)
                 .transpose(0, 2, 1, 3)
                 .reshape(B * n_heads, T, hd))

    for blk in params["blocks"]:
        # attention sub-block: LN1 fused into QKV proj, residual fused into out-proj
        qkv = ln_matmul(h, blk["ln1_g"], blk["ln1_b"], blk["w_attn"])    # (B*T, 3D)
        q, k, v = jnp.split(qkv, 3, axis=-1)
        a = attention(to_heads(q), to_heads(k), to_heads(v))             # (B*H, T, hd)
        a = a.reshape(B, n_heads, T, hd).transpose(0, 2, 1, 3).reshape(B * T, D)
        h = matmul_residual(a, blk["w_attn_proj"], h)                    # h + a @ Wproj
        # MLP sub-block: LN2 + fc + gelu + proj + residual fused, row-tiled
        h = mlp_block(h, blk["ln2_g"], blk["ln2_b"], blk["w_fc"], blk["w_mlp_proj"])

    # final LN + weight-tied LM head + cross-entropy (vocab-tiled, online LSE)
    logits, loss_rows, valid = lmhead_cross_entropy(
        h, params["lnf_g"], params["lnf_b"], params["wte"],
        targets.reshape(-1), pad_id)
    loss = jnp.sum(loss_rows) / jnp.maximum(jnp.sum(valid), 1.0)
    return logits.reshape(B, T, V), loss


# --------------------------------- main -------------------------------------

if __name__ == "__main__":
    # Small config consistent with the module's __init__:
    # vocab_size, max_seq_len (n_positions), d_embed, n_layers, n_heads, dropout, bias=False
    B, T = 2, 8
    VOCAB, N_POS, D_EMBED, N_LAYERS, N_HEADS = 64, 16, 32, 2, 4
    PAD_ID = 0

    key = jax.random.PRNGKey(0)
    kp, kx, kt = jax.random.split(key, 3)
    params = init_params(kp, vocab_size=VOCAB, n_positions=N_POS,
                         d_embed=D_EMBED, n_layers=N_LAYERS)

    x = jax.random.randint(kx, (B, T), 0, VOCAB, dtype=jnp.int32)
    targets = jax.random.randint(kt, (B, T), 0, VOCAB, dtype=jnp.int32)
    targets = targets.at[:, -1].set(PAD_ID)   # exercise ignore_index path

    logits, loss = gpt2_forward(params, x, targets, n_heads=N_HEADS, pad_id=PAD_ID)
    jax.block_until_ready((logits, loss))

    assert logits.shape == (B, T, VOCAB) and logits.dtype == jnp.float32
    assert loss.shape == () and bool(jnp.isfinite(loss))
    print("KERNEL_OK")
</pallas_src>

<mosaic_0001>
module attributes {stable_mosaic.version = 11 : i64} {
  func.func @_ln_matmul_kernel(%arg0: i32, %arg1: i32, %arg2: memref<16x32xf32, #tpu.memory_space<vmem>>, %arg3: memref<1x32xf32, #tpu.memory_space<vmem>>, %arg4: memref<1x32xf32, #tpu.memory_space<vmem>>, %arg5: memref<32x96xbf16, #tpu.memory_space<vmem>>, %arg6: memref<16x96xf32, #tpu.memory_space<vmem>>) attributes {dimension_semantics = [#tpu.dimension_semantics<parallel>, #tpu.dimension_semantics<parallel>], iteration_bounds = array<i64: 1, 1>, scalar_prefetch = 0 : i64, scratch_operands = 0 : i64, tpu.core_type = #tpu.core_type<tc>, window_params = [{transform_indices = @transform_0, window_bounds = array<i64: 16, 32>}, {pipeline_mode = #tpu.pipeline_mode<synchronous>, transform_indices = @transform_1, window_bounds = array<i64: 1, 32>}, {pipeline_mode = #tpu.pipeline_mode<synchronous>, transform_indices = @transform_2, window_bounds = array<i64: 1, 32>}, {transform_indices = @transform_3, window_bounds = array<i64: 32, 96>}, {transform_indices = @transform_4, window_bounds = array<i64: 16, 96>}]} {
    %c0 = arith.constant 0 : index
    %c0_0 = arith.constant 0 : index
    %0 = vector.load %arg2[%c0, %c0_0] : memref<16x32xf32, #tpu.memory_space<vmem>>, vector<16x32xf32>
    %cst = arith.constant dense<0.000000e+00> : vector<16xf32>
    %1 = vector.multi_reduction <add>, %0, %cst [1] : vector<16x32xf32> to vector<16xf32>
    %2 = vector.shape_cast %1 : vector<16xf32> to vector<16x1xf32>
    %cst_1 = arith.constant 3.200000e+01 : f32
    %3 = vector.broadcast %cst_1 : f32 to vector<16x1xf32>
    %4 = arith.divf %2, %3 : vector<16x1xf32>
    %5 = vector.broadcast %4 : vector<16x1xf32> to vector<16x32xf32>
    %6 = arith.subf %0, %5 : vector<16x32xf32>
    %7 = arith.mulf %6, %6 : vector<16x32xf32>
    %cst_2 = arith.constant dense<0.000000e+00> : vector<16xf32>
    %8 = vector.multi_reduction <add>, %7, %cst_2 [1] : vector<16x32xf32> to vector<16xf32>
    %9 = vector.shape_cast %8 : vector<16xf32> to vector<16x1xf32>
    %cst_3 = arith.constant 3.200000e+01 : f32
    %10 = vector.broadcast %cst_3 : f32 to vector<16x1xf32>
    %11 = arith.divf %9, %10 : vector<16x1xf32>
    %cst_4 = arith.constant 9.99999974E-6 : f32
    %12 = vector.broadcast %cst_4 : f32 to vector<16x1xf32>
    %13 = arith.addf %11, %12 : vector<16x1xf32>
    %14 = math.rsqrt %13 : vector<16x1xf32>
    %15 = vector.broadcast %14 : vector<16x1xf32> to vector<16x32xf32>
    %16 = arith.mulf %6, %15 : vector<16x32xf32>
    %c0_5 = arith.constant 0 : index
    %c0_6 = arith.constant 0 : index
    %17 = vector.load %arg3[%c0_5, %c0_6] : memref<1x32xf32, #tpu.memory_space<vmem>>, vector<1x32xf32>
    %18 = vector.broadcast %17 : vector<1x32xf32> to vector<16x32xf32>
    %19 = arith.mulf %16, %18 : vector<16x32xf32>
    %c0_7 = arith.constant 0 : index
    %c0_8 = arith.constant 0 : index
    %20 = vector.load %arg4[%c0_7, %c0_8] : memref<1x32xf32, #tpu.memory_space<vmem>>, vector<1x32xf32>
    %21 = vector.broadcast %20 : vector<1x32xf32> to vector<16x32xf32>
    %22 = arith.addf %19, %21 : vector<16x32xf32>
    %23 = arith.truncf %22 : vector<16x32xf32> to vector<16x32xbf16>
    %c0_9 = arith.constant 0 : index
    %c0_10 = arith.constant 0 : index
    %24 = vector.load %arg5[%c0_9, %c0_10] : memref<32x96xbf16, #tpu.memory_space<vmem>>, vector<32x96xbf16>
    %cst_11 = arith.constant dense<0.000000e+00> : vector<16x96xf32>
    %25 = tpu.matmul %23, %24, %cst_11 {dimension_numbers = #tpu.dot_dimension_numbers<[1], [0], [0], [1], [0, 0, 1, 1], [], []>} : vector<16x32xbf16>, vector<32x96xbf16>, vector<16x96xf32> -> vector<16x96xf32>
    %c0_12 = arith.constant 0 : index
    %c0_13 = arith.constant 0 : index
    %26 = vector.load %arg6[%c0_12, %c0_13] : memref<16x96xf32, #tpu.memory_space<vmem>>, vector<16x96xf32>
    tpu.vector_store %arg6[%c0_12, %c0_13], %25 {strides = array<i32>} : memref<16x96xf32, #tpu.memory_space<vmem>>, vector<16x96xf32>,
    return
  }
  func.func @transform_0(%arg0: i32, %arg1: i32) -> (i32, i32) {
    %c0_i32 = arith.constant 0 : i32
    %c0_i32_0 = arith.constant 0 : i32
    return %arg0, %c0_i32 : i32, i32
  }
  func.func @transform_1(%arg0: i32, %arg1: i32) -> (i32, i32) {
    %c0_i32 = arith.constant 0 : i32
    %c0_i32_0 = arith.constant 0 : i32
    %c0_i32_1 = arith.constant 0 : i32
    return %c0_i32, %c0_i32_0 : i32, i32
  }
  func.func @transform_2(%arg0: i32, %arg1: i32) -> (i32, i32) {
    %c0_i32 = arith.constant 0 : i32
    %c0_i32_0 = arith.constant 0 : i32
    %c0_i32_1 = arith.constant 0 : i32
    return %c0_i32, %c0_i32_0 : i32, i32
  }
  func.func @transform_3(%arg0: i32, %arg1: i32) -> (i32, i32) {
    %c0_i32 = arith.constant 0 : i32
    %c0_i32_0 = arith.constant 0 : i32
    return %c0_i32, %arg1 : i32, i32
  }
  func.func @transform_4(%arg0: i32, %arg1: i32) -> (i32, i32) {
    %c0_i32 = arith.constant 0 : i32
    return %arg0, %arg1 : i32, i32
  }
}

</mosaic_0001>

<llo_original>
// kernel: tpu_custom_call.1
$region0: #{tpu_custom_call.1}
  #allocation0 [shape = 'u32[]', space=smem, size = 0x4, offset = 0x4, fixed_abs, tag = 'smem constant byte address 0x4 - core index']
  #allocation1 [shape = 'u32[144,128]{1,0:T(1,128)}', space=vmem, size = 0x12000, scoped, tag = 'internal scratch']
  %s0 = inlined_call_operand.hbm [shape: f32[16,32], index: 0, kind: input, shape index: {}]
  %s1 = inlined_call_operand.vmem [shape: f32[1,32], index: 1, kind: input, shape index: {}]
  %s2 = inlined_call_operand.vmem [shape: f32[1,32], index: 2, kind: input, shape index: {}]
  %s3 = inlined_call_operand.hbm [shape: bf16[32,96], index: 3, kind: input, shape index: {}]
  %s4 = inlined_call_operand.hbm [shape: f32[16,96], index: 4, kind: output, shape index: {}]
  %s5 = sld [smem:[#allocation0]]
  $region34: #{tpu_custom_call.1} parent=0
    _
  %s7 = ssub.s32 1, %s5
  %s8 = scalar_select 0, %s7, %s5
  $region1: #{tpu_custom_call.1} parent=0
    #allocation2 [shape = 'u8[8192]{0}', space=vmem, size = 0x2000, scoped, tag = 'input window, operand 0, single buffered']
    #allocation3 [shape = 's32[1]{0}', space=sflag, size = 0x4, scoped, tag = 'scoped memory for tpu_custom_call.1']
    #allocation4 [shape = 's32[1]{0}', space=sflag, size = 0x4, scoped, tag = 'scoped memory for tpu_custom_call.1']
    #allocation5 [shape = 'u8[8192]{0}', space=vmem, size = 0x2000, scoped, tag = 'input window, operand 3, single buffered']
    #allocation6 [shape = 's32[1]{0}', space=sflag, size = 0x4, scoped, tag = 'scoped memory for tpu_custom_call.1']
    #allocation7 [shape = 'u8[8192]{0}', space=vmem, size = 0x2000, scoped, tag = 'output window, operand 0, single buffered']
    %9 = vsyncpa [#allocation3], 0
    %10 = vsyncpa [#allocation6], 0
    %11 = vsyncpa [#allocation4], 0
    // Predicated region
    $region2: #{tpu_custom_call.1} parent=1 // pred_check
      _
    $region3: #{tpu_custom_call.1} parent=1 // pred_check_branch
      %13 = sbr.rel (0) target = $region5
    $region4: #{tpu_custom_call.1} parent=1 // pred_region
      %s15 = ssub.s32 256, 256
      %16 = vsyncadd [#allocation3], %s15
      %s17 = sshll.u32 [#allocation2], 4
      %s18 = int_to_ptr.vmem [resolvable:$true] %s17
      %23 = dma.hbm_to_vmem [thread:$0]  %s0, 256, %s18, [#allocation3], 128, 128, 8
    $region5: #{tpu_custom_call.1} parent=1 // pred_fallthru
      _
    // Predicated region
    $region6: #{tpu_custom_call.1} parent=1 // pred_check
      _
    $region7: #{tpu_custom_call.1} parent=1 // pred_check_branch
      %25 = sbr.rel (0) target = $region9
    $region8: #{tpu_custom_call.1} parent=1 // pred_region
      _
    $region9: #{tpu_custom_call.1} parent=1 // pred_fallthru
      _
    // Predicated region
    $region10: #{tpu_custom_call.1} parent=1 // pred_check
      _
    $region11: #{tpu_custom_call.1} parent=1 // pred_check_branch
      %27 = sbr.rel (0) target = $region13
    $region12: #{tpu_custom_call.1} parent=1 // pred_region
      _
    $region13: #{tpu_custom_call.1} parent=1 // pred_fallthru
      _
    // Predicated region
    $region14: #{tpu_custom_call.1} parent=1 // pred_check
      _
    $region15: #{tpu_custom_call.1} parent=1 // pred_check_branch
      %29 = sbr.rel (0) target = $region17
    $region16: #{tpu_custom_call.1} parent=1 // pred_region
      %s31 = ssub.s32 256, 256
      %32 = vsyncadd [#allocation6], %s31
      %s33 = sshll.u32 [#allocation5], 4
      %s34 = int_to_ptr.vmem [resolvable:$true] %s33
      %39 = dma.hbm_to_vmem [thread:$0]  %s3, 256, %s34, [#allocation6], 64, 64, 4
    $region17: #{tpu_custom_call.1} parent=1 // pred_fallthru
      _
    // Predicated region
    $region18: #{tpu_custom_call.1} parent=1 // pred_check
      _
    $region19: #{tpu_custom_call.1} parent=1 // pred_check_branch
      %41 = sbr.rel (0) target = $region21
    $region20: #{tpu_custom_call.1} parent=1 // pred_region
      %42 = dma.done [#allocation3], 256
    $region21: #{tpu_custom_call.1} parent=1 // pred_fallthru
      _
    // Predicated region
    $region22: #{tpu_custom_call.1} parent=1 // pred_check
      _
    $region23: #{tpu_custom_call.1} parent=1 // pred_check_branch
      %44 = sbr.rel (0) target = $region25
    $region24: #{tpu_custom_call.1} parent=1 // pred_region
      %45 = dma.done [#allocation6], 256
    $region25: #{tpu_custom_call.1} parent=1 // pred_fallthru
      _
    %v47 = vld [vmem:[#allocation2] sm:$0xff]
    %v48 = vld [vmem:[#allocation2 + $0x8] sm:$0xff]
    %vm49 = vcmask 261120
    %v50 = vsel %vm49, %v47, 0.0
    %51 = vadd.xlane.f32.xlu0 %v50
    %v52 = vpop.xlane.xlu0 %51
    %v53 = vsel %vm49, %v48, 0.0
    %54 = vadd.xlane.f32.xlu0 %v53
    %v55 = vpop.xlane.xlu0 %54
    %v56 = vrcp.pop 32.0
    %v57 = vmul.f32 %v52, %v56
    %v58 = vmul.f32 %v55, %v56
    %v59 = vsub.f32 %v47, %v57
    %v60 = vsub.f32 %v48, %v58
    %v61 = vmul.f32 %v59, %v59
    %v62 = vmul.f32 %v60, %v60
    %v63 = vsel %vm49, %v61, 0.0
    %64 = vadd.xlane.f32.xlu0 %v63
    %v65 = vpop.xlane.xlu0 %64
    %v66 = vsel %vm49, %v62, 0.0
    %67 = vadd.xlane.f32.xlu0 %v66
    %v68 = vpop.xlane.xlu0 %67
    %v69 = vmul.f32 %v65, %v56
    %v70 = vmul.f32 %v68, %v56
    %v71 = vadd.f32 %v69, 1e-05
    %v72 = vadd.f32 %v70, 1e-05
    %v73 = vrsqrt.pop %v71
    %v74 = vrsqrt.pop %v72
    %v75 = vmul.f32 %v59, %v73
    %v76 = vmul.f32 %v60, %v74
    %v77 = vld [vmem:[%s1] sm:$0x1]
    %v79 = vlaneseq
    %v80 = vshrl.u32 %v79, 7
    %v81 = vsub.s32 0, %v80
    %v82 = vrot.slane %v77, %v81
    %v84 = vmul.f32 %v75, %v82
    %v85 = vmul.f32 %v76, %v82
    %v86 = vld [vmem:[%s2] sm:$0x1]
    %v88 = vlaneseq
    %v89 = vshrl.u32 %v88, 7
    %v90 = vsub.s32 0, %v89
    %v91 = vrot.slane %v86, %v90
    %v93 = vadd.f32 %v84, %v91
    %v94 = vadd.f32 %v85, %v91
    %v95 = vpack.c.bf16 %v94, %v93
    %v96 = vld [vmem:[#allocation5] sm:$0xf]
    %v97 = vld [vmem:[#allocation5 + $0x4] sm:$0xf]
    %v98 = vld [vmem:[#allocation5 + $0x8] sm:$0xf]
    %v99 = vld [vmem:[#allocation5 + $0xc] sm:$0xf]
    %v104 = vunpack.c.l.b16 %v96
    %v105 = vunpack.c.l.b16 %v97
    %v106 = vunpack.c.l.b16 %v98
    %v107 = vunpack.c.l.b16 %v99
    %v108 = vpack.c.b16 %v105, %v104
    %v109 = vpack.c.b16 %v107, %v106
    %v113 = vsel %vm49, %v95, 0
    %115 = vmatprep.subr.bf16.mxu0 0
    %116 = vmatpush1.bf16.msra.mxu0 %v108
    %117 = vmatprep.subr.bf16.mxu0 0
    %118 = vmatpush1.bf16.msra.mxu0 %v109
    %119 = vmatprep.subr.bf16.mxu0 0
    %120 = vmatpush1.bf16.msra.mxu0 0
    %121 = vmatprep.subr.bf16.mxu0 0
    %122 = vmatpush1.bf16.msra.mxu0 0
    %123 = vmatprep.subr.bf16.mxu0 0
    %124 = vmatpush1.bf16.msra.mxu0 0
    %125 = vmatprep.subr.bf16.mxu0 0
    %126 = vmatpush1.bf16.msra.mxu0 0
    %127 = vmatprep.subr.bf16.mxu0 0
    %128 = vmatpush1.bf16.msra.mxu0 0
    %129 = vmatprep.subr.bf16.mxu0 0
    %130 = vmatpush1.bf16.msra.mxu0 0
    %131 = vmatprep.subr.bf16.mxu0 0
    %132 = vmatpush1.bf16.msra.mxu0 0
    %133 = vmatprep.subr.bf16.mxu0 0
    %134 = vmatpush1.bf16.msra.mxu0 0
    %135 = vmatprep.subr.bf16.mxu0 0
    %136 = vmatpush1.bf16.msra.mxu0 0
    %137 = vmatprep.subr.bf16.mxu0 0
    %138 = vmatpush1.bf16.msra.mxu0 0
    %139 = vmatprep.subr.bf16.mxu0 0
    %140 = vmatpush1.bf16.msra.mxu0 0
    %141 = vmatprep.subr.bf16.mxu0 0
    %142 = vmatpush1.bf16.msra.mxu0 0
    %143 = vmatprep.subr.bf16.mxu0 0
    %144 = vmatpush1.bf16.msra.mxu0 0
    %145 = vmatprep.subr.bf16.mxu0 0
    %146 = vmatpush1.bf16.msra.mxu0 0
    %147 = vmatprep.mubr.bf16.mxu0 0
    %148 = vmatmul.mubr.bf16.gmra.mrb[0].mxu0 %v113
    %v149 = vpop.f32.mrb[0].mxu0
    %v150 = vadd.f32 0.0, %v149
    %v151 = vpop.f32.mrb[0].mxu0
    %v152 = vpop.f32.mrb[0].mxu0
    %v153 = vadd.f32 0.0, %v152
    %v154 = vpop.f32.mrb[0].mxu0
    %155 = vdwg.mxu0
    %vm156 = vcmask 785408
    %157 = vst.msk [vmem:[#allocation7] sm:$0xff] %vm156, %v150
    %158 = vst.msk [vmem:[#allocation7 + $0x8] sm:$0xff] %vm156, %v153
    // Predicated region
    $region26: #{tpu_custom_call.1} parent=1 // pred_check
      _
    $region27: #{tpu_custom_call.1} parent=1 // pred_check_branch
      %160 = sbr.rel (0) target = $region29
    $region28: #{tpu_custom_call.1} parent=1 // pred_region
      %s162 = ssub.s32 256, 256
      %163 = vsyncadd [#allocation4], %s162
      %s164 = sshll.u32 [#allocation7], 4
      %s165 = int_to_ptr.vmem [resolvable:$true] %s164
      %170 = dma.vmem_to_hbm [thread:$0]  %s165, 256, %s4, [#allocation4], 128, 128, 8
    $region29: #{tpu_custom_call.1} parent=1 // pred_fallthru
      _
    // Predicated region
    $region30: #{tpu_custom_call.1} parent=1 // pred_check
      _
    $region31: #{tpu_custom_call.1} parent=1 // pred_check_branch
      %172 = sbr.rel (0) target = $region33
    $region32: #{tpu_custom_call.1} parent=1 // pred_region
      %173 = dma.done [#allocation4], 256
    $region33: #{tpu_custom_call.1} parent=1 // pred_fallthru
      _
    %174 = vsyncpa [#allocation3], 1
    %175 = vsyncpa [#allocation6], 1
    %176 = vsyncpa [#allocation4], 1

</llo_original>
